<compile_context>
chip_gen: v7x
topology: tpu7x:2x2x1
jax: 0.10.0
libtpu: 0.0.40
codegen_flags: <defaults>
</compile_context>

<pallas_src>
import jax
import jax.numpy as jnp
from jax.experimental import pallas as pl
from jax.experimental.pallas import tpu as pltpu

IN_FEATURES = 4
HIDDEN = 512


def ddqn_fused_kernel(x_ref, w1b_ref, w2b_ref, out_ref):
    x = x_ref[...]                                           # (B, 4)

    # ---- layer 1, both streams fused: h = relu(x @ W1 + b1) ----
    # W1b is (5, 1024): rows 0:4 = [w1v | w1a], row 4 = [b1v | b1a]
    w1 = w1b_ref[0:IN_FEATURES, :]                           # (4, 1024)
    b1 = w1b_ref[IN_FEATURES:IN_FEATURES + 1, :]             # (1, 1024)
    h = jnp.maximum(
        jnp.dot(x, w1, preferred_element_type=jnp.float32) + b1, 0.0)   # (B, 1024)

    # ---- layer 2, block-diagonal fusion: one MXU pass -> [value | advantage] ----
    # W2b is (1025, 1+A): rows 0:1024 = block-diag(w2v, w2a), row 1024 = [b2v | b2a]
    k2 = 2 * HIDDEN
    w2 = w2b_ref[0:k2, :]                                    # (1024, 1+A)
    b2 = w2b_ref[k2:k2 + 1, :]                               # (1, 1+A)
    vq = jnp.dot(h, w2, preferred_element_type=jnp.float32) + b2        # (B, 1+A)

    value = vq[:, :1]                                        # (B, 1)
    adv = vq[:, 1:]                                          # (B, A)

    # Global scalar mean over the whole advantage tensor, exactly like torch's .mean().
    out_ref[...] = value + adv - jnp.mean(adv)               # (B, A)


def pack_params(p):
    """Fuse value/advantage streams and fold biases into packed weights (done ONCE, offline)."""
    A = p["w2a"].shape[1]

    w1 = jnp.concatenate([p["w1v"], p["w1a"]], axis=1)       # (4, 1024)
    b1 = jnp.concatenate([p["b1v"], p["b1a"]], axis=1)       # (1, 1024)
    w1b = jnp.concatenate([w1, b1], axis=0)                  # (5, 1024)

    w2 = jnp.zeros((2 * HIDDEN, 1 + A), jnp.float32)
    w2 = w2.at[:HIDDEN, :1].set(p["w2v"])                    # value head -> col 0
    w2 = w2.at[HIDDEN:, 1:].set(p["w2a"])                    # advantage head -> cols 1:
    b2 = jnp.concatenate([p["b2v"], p["b2a"]], axis=1)       # (1, 1+A)
    w2b = jnp.concatenate([w2, b2], axis=0)                  # (1025, 1+A)

    return w1b, w2b


def linear_ddqn_forward(x, w1b, w2b):
    """x: (B, 4) float32, packed weights from pack_params. Returns (B, num_actions)."""
    B = x.shape[0]
    A = w2b.shape[1] - 1

    # Whole problem fits easily in VMEM -> single grid point, full-array blocks.
    vmem = pl.BlockSpec(memory_space=pltpu.MemorySpace.VMEM)
    return pl.pallas_call(
        ddqn_fused_kernel,
        out_shape=jax.ShapeDtypeStruct((B, A), jnp.float32),
        in_specs=[vmem, vmem, vmem],
        out_specs=vmem,
    )(x, w1b, w2b)


def init_params(key, num_actions, hidden=HIDDEN, in_features=IN_FEATURES):
    """Synthetic init mimicking torch.nn.Linear default (U[-1/sqrt(fan_in), 1/sqrt(fan_in)])."""
    ks = jax.random.split(key, 8)

    def lin(kw, kb, fan_in, fan_out):
        bound = 1.0 / jnp.sqrt(jnp.float32(fan_in))
        w = jax.random.uniform(kw, (fan_in, fan_out), jnp.float32, -bound, bound)
        b = jax.random.uniform(kb, (1, fan_out), jnp.float32, -bound, bound)
        return w, b

    w1v, b1v = lin(ks[0], ks[1], in_features, hidden)
    w2v, b2v = lin(ks[2], ks[3], hidden, 1)
    w1a, b1a = lin(ks[4], ks[5], in_features, hidden)
    w2a, b2a = lin(ks[6], ks[7], hidden, num_actions)
    return {"w1v": w1v, "b1v": b1v, "w2v": w2v, "b2v": b2v,
            "w1a": w1a, "b1a": b1a, "w2a": w2a, "b2a": b2a}


def reference_forward(x, p):
    """Pure-JAX reference on the ORIGINAL (unfused) parameters."""
    hv = jnp.maximum(x @ p["w1v"] + p["b1v"], 0.0)
    value = hv @ p["w2v"] + p["b2v"]
    ha = jnp.maximum(x @ p["w1a"] + p["b1a"], 0.0)
    adv = ha @ p["w2a"] + p["b2a"]
    return value + adv - jnp.mean(adv)


if __name__ == "__main__":
    key = jax.random.PRNGKey(0)
    k_x, k_p = jax.random.split(key)

    batch = 8
    num_actions = 6

    x = jax.random.normal(k_x, (batch, 4), jnp.float32)
    params = init_params(k_p, num_actions)

    # Pack/fuse weights once; reuse across calls (weights are not re-built per step).
    w1b, w2b = pack_params(params)

    fwd = jax.jit(linear_ddqn_forward)
    out = fwd(x, w1b, w2b)
    out = jax.block_until_ready(out)

    ref = reference_forward(x, params)
    assert out.shape == (batch, num_actions)
    assert jnp.allclose(out, ref, atol=1e-5, rtol=1e-5), "mismatch vs reference"

    print("KERNEL_OK")
</pallas_src>

<mosaic_0001>
module attributes {stable_mosaic.version = 11 : i64} {
  func.func @ddqn_fused_kernel(%arg0: memref<8x4xf32, #tpu.memory_space<vmem>>, %arg1: memref<5x1024xf32, #tpu.memory_space<vmem>>, %arg2: memref<1025x7xf32, #tpu.memory_space<vmem>>, %arg3: memref<8x6xf32, #tpu.memory_space<vmem>>) attributes {dimension_semantics = [], scalar_prefetch = 0 : i64, scratch_operands = 0 : i64, tpu.core_type = #tpu.core_type<tc>} {
    %c0 = arith.constant 0 : index
    %c0_0 = arith.constant 0 : index
    %0 = vector.load %arg0[%c0, %c0_0] : memref<8x4xf32, #tpu.memory_space<vmem>>, vector<8x4xf32>
    %c0_1 = arith.constant 0 : index
    %c0_2 = arith.constant 0 : index
    %1 = vector.load %arg1[%c0_1, %c0_2] : memref<5x1024xf32, #tpu.memory_space<vmem>>, vector<4x1024xf32>
    %c4 = arith.constant 4 : index
    %c0_3 = arith.constant 0 : index
    %2 = vector.load %arg1[%c4, %c0_3] : memref<5x1024xf32, #tpu.memory_space<vmem>>, vector<1x1024xf32>
    %cst = arith.constant dense<0.000000e+00> : vector<8x1024xf32>
    %3 = tpu.matmul %0, %1, %cst {dimension_numbers = #tpu.dot_dimension_numbers<[1], [0], [0], [1], [0, 0, 1, 1], [], []>} : vector<8x4xf32>, vector<4x1024xf32>, vector<8x1024xf32> -> vector<8x1024xf32>
    %4 = vector.broadcast %2 : vector<1x1024xf32> to vector<8x1024xf32>
    %5 = arith.addf %3, %4 : vector<8x1024xf32>
    %cst_4 = arith.constant 0.000000e+00 : f32
    %6 = vector.broadcast %cst_4 : f32 to vector<8x1024xf32>
    %7 = arith.maximumf %5, %6 : vector<8x1024xf32>
    %c0_5 = arith.constant 0 : index
    %c0_6 = arith.constant 0 : index
    %8 = vector.load %arg2[%c0_5, %c0_6] : memref<1025x7xf32, #tpu.memory_space<vmem>>, vector<1024x7xf32>
    %c1024 = arith.constant 1024 : index
    %c0_7 = arith.constant 0 : index
    %9 = vector.load %arg2[%c1024, %c0_7] : memref<1025x7xf32, #tpu.memory_space<vmem>>, vector<1x7xf32>
    %cst_8 = arith.constant dense<0.000000e+00> : vector<8x7xf32>
    %10 = tpu.matmul %7, %8, %cst_8 {dimension_numbers = #tpu.dot_dimension_numbers<[1], [0], [0], [1], [0, 0, 1, 1], [], []>} : vector<8x1024xf32>, vector<1024x7xf32>, vector<8x7xf32> -> vector<8x7xf32>
    %11 = vector.broadcast %9 : vector<1x7xf32> to vector<8x7xf32>
    %12 = arith.addf %10, %11 : vector<8x7xf32>
    %13 = vector.extract_strided_slice %12 {offsets = [0, 0], sizes = [8, 1], strides = [1, 1]} : vector<8x7xf32> to vector<8x1xf32>
    %14 = vector.extract_strided_slice %12 {offsets = [0, 1], sizes = [8, 6], strides = [1, 1]} : vector<8x7xf32> to vector<8x6xf32>
    %15 = vector.broadcast %13 : vector<8x1xf32> to vector<8x6xf32>
    %16 = arith.addf %15, %14 : vector<8x6xf32>
    %17 = vector.shape_cast %14 : vector<8x6xf32> to vector<1x8x6xf32>
    %cst_9 = arith.constant dense<0.000000e+00> : vector<1xf32>
    %18 = vector.multi_reduction <add>, %17, %cst_9 [1, 2] : vector<1x8x6xf32> to vector<1xf32>
    %19 = vector.shape_cast %18 : vector<1xf32> to vector<1x1x1xf32>
    %20 = vector.extract %19[0, 0, 0] : f32 from vector<1x1x1xf32>
    %cst_10 = arith.constant 4.800000e+01 : f32
    %21 = arith.divf %20, %cst_10 : f32
    %22 = vector.broadcast %21 : f32 to vector<8x6xf32>
    %23 = arith.subf %16, %22 : vector<8x6xf32>
    %c0_11 = arith.constant 0 : index
    %c0_12 = arith.constant 0 : index
    %24 = vector.load %arg3[%c0_11, %c0_12] : memref<8x6xf32, #tpu.memory_space<vmem>>, vector<8x6xf32>
    tpu.vector_store %arg3[%c0_11, %c0_12], %23 {strides = array<i32>} : memref<8x6xf32, #tpu.memory_space<vmem>>, vector<8x6xf32>,
    return
  }
}

</mosaic_0001>

<llo_original>
// kernel: linear_ddqn_forward.1
$region0: #{linear_ddqn_forward.1}
  #allocation0 [shape = 'u32[]', space=smem, size = 0x4, offset = 0x4, fixed_abs, tag = 'smem constant byte address 0x4 - core index']
  #allocation1 [shape = 'u32[144,128]{1,0:T(1,128)}', space=vmem, size = 0x12000, scoped, tag = 'internal scratch']
  %s0 = inlined_call_operand.vmem [shape: f32[8,4], index: 0, kind: input, shape index: {}]
  %s1 = inlined_call_operand.vmem [shape: f32[5,1024], index: 1, kind: input, shape index: {}]
  %s2 = inlined_call_operand.vmem [shape: f32[1025,7], index: 2, kind: input, shape index: {}]
  %s3 = inlined_call_operand.hbm [shape: f32[8,6], index: 3, kind: output, shape index: {}]
  %s4 = sld [smem:[#allocation0]]
  $region22: #{linear_ddqn_forward.1} parent=0
    _
  %s6 = ssub.s32 1, %s4
  %s7 = scalar_select 0, %s6, %s4
  $region1: #{linear_ddqn_forward.1} parent=0
    #allocation2 [shape = 'u8[4096]{0}', space=vmem, size = 0x1000, scoped, tag = 'output window, operand 0, single buffered']
    #allocation3 [shape = 's32[1]{0}', space=sflag, size = 0x4, scoped, tag = 'scoped memory for linear_ddqn_forward.1']
    %8 = vsyncpa [#allocation3], 0
    // Predicated region
    $region2: #{linear_ddqn_forward.1} parent=1 // pred_check
      _
    $region3: #{linear_ddqn_forward.1} parent=1 // pred_check_branch
      %10 = sbr.rel (0) target = $region5
    $region4: #{linear_ddqn_forward.1} parent=1 // pred_region
      _
    $region5: #{linear_ddqn_forward.1} parent=1 // pred_fallthru
      _
    // Predicated region
    $region6: #{linear_ddqn_forward.1} parent=1 // pred_check
      _
    $region7: #{linear_ddqn_forward.1} parent=1 // pred_check_branch
      %12 = sbr.rel (0) target = $region9
    $region8: #{linear_ddqn_forward.1} parent=1 // pred_region
      _
    $region9: #{linear_ddqn_forward.1} parent=1 // pred_fallthru
      _
    // Predicated region
    $region10: #{linear_ddqn_forward.1} parent=1 // pred_check
      _
    $region11: #{linear_ddqn_forward.1} parent=1 // pred_check_branch
      %14 = sbr.rel (0) target = $region13
    $region12: #{linear_ddqn_forward.1} parent=1 // pred_region
      _
    $region13: #{linear_ddqn_forward.1} parent=1 // pred_fallthru
      _
    %v15 = vld [vmem:[%s0] sm:$0xff]
    %v16 = vld [vmem:[%s1] sm:$0xf]
    %v17 = vld [vmem:[%s1 + $0x8] sm:$0xf]
    %v18 = vld [vmem:[%s1 + $0x10] sm:$0xf]
    %v19 = vld [vmem:[%s1 + $0x18] sm:$0xf]
    %v20 = vld [vmem:[%s1 + $0x20] sm:$0xf]
    %v21 = vld [vmem:[%s1 + $0x28] sm:$0xf]
    %v22 = vld [vmem:[%s1 + $0x30] sm:$0xf]
    %v23 = vld [vmem:[%s1 + $0x38] sm:$0xf]
    %s24 = scalar_lea.vmem %s1, 4
    %v25 = vld [vmem:[%s24] ss:$8 sm:$0xf]
    %v26 = vld [vmem:[%s24] ss:$8 sm:$0xf0]
    %v27 = vor.u32 %v25, %v26
    %v29 = vlaneseq
    %v30 = vshrl.u32 %v29, 7
    %v31 = vsub.s32 0, %v30
    %v32 = vrot.slane %v27, %v31
    %v33 = vlaneseq
    %v34 = vshrl.u32 %v33, 7
    %v35 = vsub.s32 1, %v34
    %v36 = vrot.slane %v27, %v35
    %v37 = vlaneseq
    %v38 = vshrl.u32 %v37, 7
    %v39 = vsub.s32 2, %v38
    %v40 = vrot.slane %v27, %v39
    %v41 = vlaneseq
    %v42 = vshrl.u32 %v41, 7
    %v43 = vsub.s32 3, %v42
    %v44 = vrot.slane %v27, %v43
    %v45 = vlaneseq
    %v46 = vshrl.u32 %v45, 7
    %v47 = vsub.s32 4, %v46
    %v48 = vrot.slane %v27, %v47
    %v49 = vlaneseq
    %v50 = vshrl.u32 %v49, 7
    %v51 = vsub.s32 5, %v50
    %v52 = vrot.slane %v27, %v51
    %v53 = vlaneseq
    %v54 = vshrl.u32 %v53, 7
    %v55 = vsub.s32 6, %v54
    %v56 = vrot.slane %v27, %v55
    %v57 = vlaneseq
    %v58 = vshrl.u32 %v57, 7
    %v59 = vsub.s32 7, %v58
    %v60 = vrot.slane %v27, %v59
    %vm69 = vcmask 31744
    %v71 = vsel %vm69, %v15, 0
    %vm73 = vcmask 1043456
    %v75 = vsel %vm73, %v16, 0
    %v78 = vsel %vm73, %v17, 0
    %v81 = vsel %vm73, %v18, 0
    %v84 = vsel %vm73, %v19, 0
    %v87 = vsel %vm73, %v20, 0
    %v90 = vsel %vm73, %v21, 0
    %v93 = vsel %vm73, %v22, 0
    %v96 = vsel %vm73, %v23, 0
    %98 = vmatprep.subr.mxu0 %v78
    %99 = vmatpush1.msra.mxu0 %v75
    %100 = vmatprep.subr.mxu0 0.0
    %101 = vmatpush1.msra.mxu0 0.0
    %102 = vmatprep.subr.mxu0 0.0
    %103 = vmatpush1.msra.mxu0 0.0
    %104 = vmatprep.subr.mxu0 0.0
    %105 = vmatpush1.msra.mxu0 0.0
    %106 = vmatprep.subr.mxu0 0.0
    %107 = vmatpush1.msra.mxu0 0.0
    %108 = vmatprep.subr.mxu0 0.0
    %109 = vmatpush1.msra.mxu0 0.0
    %110 = vmatprep.subr.mxu0 0.0
    %111 = vmatpush1.msra.mxu0 0.0
    %112 = vmatprep.subr.mxu0 0.0
    %113 = vmatpush1.msra.mxu0 0.0
    %114 = vmatprep.subr.mxu0 0.0
    %115 = vmatpush1.msra.mxu0 0.0
    %116 = vmatprep.subr.mxu0 0.0
    %117 = vmatpush1.msra.mxu0 0.0
    %118 = vmatprep.subr.mxu0 0.0
    %119 = vmatpush1.msra.mxu0 0.0
    %120 = vmatprep.subr.mxu0 0.0
    %121 = vmatpush1.msra.mxu0 0.0
    %122 = vmatprep.subr.mxu0 0.0
    %123 = vmatpush1.msra.mxu0 0.0
    %124 = vmatprep.subr.mxu0 0.0
    %125 = vmatpush1.msra.mxu0 0.0
    %126 = vmatprep.subr.mxu0 0.0
    %127 = vmatpush1.msra.mxu0 0.0
    %128 = vmatprep.subr.mxu0 0.0
    %129 = vmatpush1.msra.mxu0 0.0
    %130 = vmatprep.subr.mxu0 0.0
    %131 = vmatpush1.msra.mxu0 0.0
    %132 = vmatprep.subr.mxu0 0.0
    %133 = vmatpush1.msra.mxu0 0.0
    %134 = vmatprep.subr.mxu0 0.0
    %135 = vmatpush1.msra.mxu0 0.0
    %136 = vmatprep.subr.mxu0 0.0
    %137 = vmatpush1.msra.mxu0 0.0
    %138 = vmatprep.subr.mxu0 0.0
    %139 = vmatpush1.msra.mxu0 0.0
    %140 = vmatprep.subr.mxu0 0.0
    %141 = vmatpush1.msra.mxu0 0.0
    %142 = vmatprep.subr.mxu0 0.0
    %143 = vmatpush1.msra.mxu0 0.0
    %144 = vmatprep.subr.mxu0 0.0
    %145 = vmatpush1.msra.mxu0 0.0
    %146 = vmatprep.subr.mxu0 0.0
    %147 = vmatpush1.msra.mxu0 0.0
    %148 = vmatprep.subr.mxu0 0.0
    %149 = vmatpush1.msra.mxu0 0.0
    %150 = vmatprep.subr.mxu0 0.0
    %151 = vmatpush1.msra.mxu0 0.0
    %152 = vmatprep.subr.mxu0 0.0
    %153 = vmatpush1.msra.mxu0 0.0
    %154 = vmatprep.subr.mxu0 0.0
    %155 = vmatpush1.msra.mxu0 0.0
    %156 = vmatprep.subr.mxu0 0.0
    %157 = vmatpush1.msra.mxu0 0.0
    %158 = vmatprep.subr.mxu0 0.0
    %159 = vmatpush1.msra.mxu0 0.0
    %160 = vmatprep.subr.mxu0 0.0
    %161 = vmatpush1.msra.mxu0 0.0
    %162 = vmatprep.mubr.f32.mxu0 0.0
    %163 = vmatmul.mubr.f32.gmra.mrb[0].mxu0 %v71
    %v164 = vpop.f32.mrb[0].mxu0
    %v165 = vadd.f32 %v32, %v164
    %v166 = vpop.f32.mrb[0].mxu0
    %v167 = vadd.f32 %v36, %v166
    %168 = vdwg.mxu0
    %169 = vmatprep.subr.mxu0 %v84
    %170 = vmatpush1.msra.mxu0 %v81
    %171 = vmatprep.subr.mxu0 0.0
    %172 = vmatpush1.msra.mxu0 0.0
    %173 = vmatprep.subr.mxu0 0.0
    %174 = vmatpush1.msra.mxu0 0.0
    %175 = vmatprep.subr.mxu0 0.0
    %176 = vmatpush1.msra.mxu0 0.0
    %177 = vmatprep.subr.mxu0 0.0
    %178 = vmatpush1.msra.mxu0 0.0
    %179 = vmatprep.subr.mxu0 0.0
    %180 = vmatpush1.msra.mxu0 0.0
    %181 = vmatprep.subr.mxu0 0.0
    %182 = vmatpush1.msra.mxu0 0.0
    %183 = vmatprep.subr.mxu0 0.0
    %184 = vmatpush1.msra.mxu0 0.0
    %185 = vmatprep.subr.mxu0 0.0
    %186 = vmatpush1.msra.mxu0 0.0
    %187 = vmatprep.subr.mxu0 0.0
    %188 = vmatpush1.msra.mxu0 0.0
    %189 = vmatprep.subr.mxu0 0.0
    %190 = vmatpush1.msra.mxu0 0.0
    %191 = vmatprep.subr.mxu0 0.0
    %192 = vmatpush1.msra.mxu0 0.0
    %193 = vmatprep.subr.mxu0 0.0
    %194 = vmatpush1.msra.mxu0 0.0
    %195 = vmatprep.subr.mxu0 0.0
    %196 = vmatpush1.msra.mxu0 0.0
    %197 = vmatprep.subr.mxu0 0.0
    %198 = vmatpush1.msra.mxu0 0.0
    %199 = vmatprep.subr.mxu0 0.0
    %200 = vmatpush1.msra.mxu0 0.0
    %201 = vmatprep.subr.mxu0 0.0
    %202 = vmatpush1.msra.mxu0 0.0
    %203 = vmatprep.subr.mxu0 0.0
    %204 = vmatpush1.msra.mxu0 0.0
    %205 = vmatprep.subr.mxu0 0.0
    %206 = vmatpush1.msra.mxu0 0.0
    %207 = vmatprep.subr.mxu0 0.0
    %208 = vmatpush1.msra.mxu0 0.0
    %209 = vmatprep.subr.mxu0 0.0
    %210 = vmatpush1.msra.mxu0 0.0
    %211 = vmatprep.subr.mxu0 0.0
    %212 = vmatpush1.msra.mxu0 0.0
    %213 = vmatprep.subr.mxu0 0.0
    %214 = vmatpush1.msra.mxu0 0.0
    %215 = vmatprep.subr.mxu0 0.0
    %216 = vmatpush1.msra.mxu0 0.0
    %217 = vmatprep.subr.mxu0 0.0
    %218 = vmatpush1.msra.mxu0 0.0
    %219 = vmatprep.subr.mxu0 0.0
    %220 = vmatpush1.msra.mxu0 0.0
    %221 = vmatprep.subr.mxu0 0.0
    %222 = vmatpush1.msra.mxu0 0.0
    %223 = vmatprep.subr.mxu0 0.0
    %224 = vmatpush1.msra.mxu0 0.0
    %225 = vmatprep.subr.mxu0 0.0
    %226 = vmatpush1.msra.mxu0 0.0
    %227 = vmatprep.subr.mxu0 0.0
    %228 = vmatpush1.msra.mxu0 0.0
    %229 = vmatprep.subr.mxu0 0.0
    %230 = vmatpush1.msra.mxu0 0.0
    %231 = vmatprep.subr.mxu0 0.0
    %232 = vmatpush1.msra.mxu0 0.0
    %233 = vmatprep.mubr.f32.mxu0 0.0
    %234 = vmatmul.mubr.f32.gmra.mrb[0].mxu0 %v71
    %v235 = vpop.f32.mrb[0].mxu0
    %v236 = vadd.f32 %v40, %v235
    %v237 = vpop.f32.mrb[0].mxu0
    %v238 = vadd.f32 %v44, %v237
    %239 = vdwg.mxu0
    %240 = vmatprep.subr.mxu0 %v90
    %241 = vmatpush1.msra.mxu0 %v87
    %242 = vmatprep.subr.mxu0 0.0
    %243 = vmatpush1.msra.mxu0 0.0
    %244 = vmatprep.subr.mxu0 0.0
    %245 = vmatpush1.msra.mxu0 0.0
    %246 = vmatprep.subr.mxu0 0.0
    %247 = vmatpush1.msra.mxu0 0.0
    %248 = vmatprep.subr.mxu0 0.0
    %249 = vmatpush1.msra.mxu0 0.0
    %250 = vmatprep.subr.mxu0 0.0
    %251 = vmatpush1.msra.mxu0 0.0
    %252 = vmatprep.subr.mxu0 0.0
    %253 = vmatpush1.msra.mxu0 0.0
    %254 = vmatprep.subr.mxu0 0.0
    %255 = vmatpush1.msra.mxu0 0.0
    %256 = vmatprep.subr.mxu0 0.0
    %257 = vmatpush1.msra.mxu0 0.0
    %258 = vmatprep.subr.mxu0 0.0
    %259 = vmatpush1.msra.mxu0 0.0
    %260 = vmatprep.subr.mxu0 0.0
    %261 = vmatpush1.msra.mxu0 0.0
    %262 = vmatprep.subr.mxu0 0.0
    %263 = vmatpush1.msra.mxu0 0.0
    %264 = vmatprep.subr.mxu0 0.0
    %265 = vmatpush1.msra.mxu0 0.0
    %266 = vmatprep.subr.mxu0 0.0
    %267 = vmatpush1.msra.mxu0 0.0
    %268 = vmatprep.subr.mxu0 0.0
    %269 = vmatpush1.msra.mxu0 0.0
    %270 = vmatprep.subr.mxu0 0.0
    %271 = vmatpush1.msra.mxu0 0.0
    %272 = vmatprep.subr.mxu0 0.0
    %273 = vmatpush1.msra.mxu0 0.0
    %274 = vmatprep.subr.mxu0 0.0
    %275 = vmatpush1.msra.mxu0 0.0
    %276 = vmatprep.subr.mxu0 0.0
    %277 = vmatpush1.msra.mxu0 0.0
    %278 = vmatprep.subr.mxu0 0.0
    %279 = vmatpush1.msra.mxu0 0.0
    %280 = vmatprep.subr.mxu0 0.0
    %281 = vmatpush1.msra.mxu0 0.0
    %282 = vmatprep.subr.mxu0 0.0
    %283 = vmatpush1.msra.mxu0 0.0
    %284 = vmatprep.subr.mxu0 0.0
    %285 = vmatpush1.msra.mxu0 0.0
    %286 = vmatprep.subr.mxu0 0.0
    %287 = vmatpush1.msra.mxu0 0.0
    %288 = vmatprep.subr.mxu0 0.0
    %289 = vmatpush1.msra.mxu0 0.0
    %290 = vmatprep.subr.mxu0 0.0
    %291 = vmatpush1.msra.mxu0 0.0
    %292 = vmatprep.subr.mxu0 0.0
    %293 = vmatpush1.msra.mxu0 0.0
    %294 = vmatprep.subr.mxu0 0.0
    %295 = vmatpush1.msra.mxu0 0.0
    %296 = vmatprep.subr.mxu0 0.0
    %297 = vmatpush1.msra.mxu0 0.0
    %298 = vmatprep.subr.mxu0 0.0
    %299 = vmatpush1.msra.mxu0 0.0
    %300 = vmatprep.subr.mxu0 0.0
    %301 = vmatpush1.msra.mxu0 0.0
    %302 = vmatprep.subr.mxu0 0.0
    %303 = vmatpush1.msra.mxu0 0.0
    %304 = vmatprep.mubr.f32.mxu0 0.0
    %305 = vmatmul.mubr.f32.gmra.mrb[0].mxu0 %v71
    %v306 = vpop.f32.mrb[0].mxu0
    %v307 = vadd.f32 %v48, %v306
    %v308 = vpop.f32.mrb[0].mxu0
    %v309 = vadd.f32 %v52, %v308
    %310 = vdwg.mxu0
    %311 = vmatprep.subr.mxu0 %v96
    %312 = vmatpush1.msra.mxu0 %v93
    %313 = vmatprep.subr.mxu0 0.0
    %314 = vmatpush1.msra.mxu0 0.0
    %315 = vmatprep.subr.mxu0 0.0
    %316 = vmatpush1.msra.mxu0 0.0
    %317 = vmatprep.subr.mxu0 0.0
    %318 = vmatpush1.msra.mxu0 0.0
    %319 = vmatprep.subr.mxu0 0.0
    %320 = vmatpush1.msra.mxu0 0.0
    %321 = vmatprep.subr.mxu0 0.0
    %322 = vmatpush1.msra.mxu0 0.0
    %323 = vmatprep.subr.mxu0 0.0
    %324 = vmatpush1.msra.mxu0 0.0
    %325 = vmatprep.subr.mxu0 0.0
    %326 = vmatpush1.msra.mxu0 0.0
    %327 = vmatprep.subr.mxu0 0.0
    %328 = vmatpush1.msra.mxu0 0.0
    %329 = vmatprep.subr.mxu0 0.0
    %330 = vmatpush1.msra.mxu0 0.0
    %331 = vmatprep.subr.mxu0 0.0
    %332 = vmatpush1.msra.mxu0 0.0
    %333 = vmatprep.subr.mxu0 0.0
    %334 = vmatpush1.msra.mxu0 0.0
    %335 = vmatprep.subr.mxu0 0.0
    %336 = vmatpush1.msra.mxu0 0.0
    %337 = vmatprep.subr.mxu0 0.0
    %338 = vmatpush1.msra.mxu0 0.0
    %339 = vmatprep.subr.mxu0 0.0
    %340 = vmatpush1.msra.mxu0 0.0
    %341 = vmatprep.subr.mxu0 0.0
    %342 = vmatpush1.msra.mxu0 0.0
    %343 = vmatprep.subr.mxu0 0.0
    %344 = vmatpush1.msra.mxu0 0.0
    %345 = vmatprep.subr.mxu0 0.0
    %346 = vmatpush1.msra.mxu0 0.0
    %347 = vmatprep.subr.mxu0 0.0
    %348 = vmatpush1.msra.mxu0 0.0
    %349 = vmatprep.subr.mxu0 0.0
    %350 = vmatpush1.msra.mxu0 0.0
    %351 = vmatprep.subr.mxu0 0.0
    %352 = vmatpush1.msra.mxu0 0.0
    %353 = vmatprep.subr.mxu0 0.0
    %354 = vmatpush1.msra.mxu0 0.0
    %355 = vmatprep.subr.mxu0 0.0
    %356 = vmatpush1.msra.mxu0 0.0
    %357 = vmatprep.subr.mxu0 0.0
    %358 = vmatpush1.msra.mxu0 0.0
    %359 = vmatprep.subr.mxu0 0.0
    %360 = vmatpush1.msra.mxu0 0.0
    %361 = vmatprep.subr.mxu0 0.0
    %362 = vmatpush1.msra.mxu0 0.0
    %363 = vmatprep.subr.mxu0 0.0
    %364 = vmatpush1.msra.mxu0 0.0
    %365 = vmatprep.subr.mxu0 0.0
    %366 = vmatpush1.msra.mxu0 0.0
    %367 = vmatprep.subr.mxu0 0.0
    %368 = vmatpush1.msra.mxu0 0.0
    %369 = vmatprep.subr.mxu0 0.0
    %370 = vmatpush1.msra.mxu0 0.0
    %371 = vmatprep.subr.mxu0 0.0
    %372 = vmatpush1.msra.mxu0 0.0
    %373 = vmatprep.subr.mxu0 0.0
    %374 = vmatpush1.msra.mxu0 0.0
    %375 = vmatprep.mubr.f32.mxu0 0.0
    %376 = vmatmul.mubr.f32.gmra.mrb[0].mxu0 %v71
    %v377 = vpop.f32.mrb[0].mxu0
    %v378 = vadd.f32 %v56, %v377
    %v379 = vpop.f32.mrb[0].mxu0
    %v380 = vadd.f32 %v60, %v379
    %381 = vdwg.mxu0
    %v382 = vmax.f32 %v165, 0.0
    %v383 = vmax.f32 %v167, 0.0
    %v384 = vmax.f32 %v236, 0.0
    %v385 = vmax.f32 %v238, 0.0
    %v386 = vmax.f32 %v307, 0.0
    %v387 = vmax.f32 %v309, 0.0
    %v388 = vmax.f32 %v378, 0.0
    %v389 = vmax.f32 %v380, 0.0
    %v390 = vld [vmem:[%s2] sm:$0xff]
    %v391 = vld [vmem:[%s2 + $0x8] sm:$0xff]
    %v392 = vld [vmem:[%s2 + $0x10] sm:$0xff]
    %v393 = vld [vmem:[%s2 + $0x18] sm:$0xff]
    %v394 = vld [vmem:[%s2 + $0x20] sm:$0xff]
    %v395 = vld [vmem:[%s2 + $0x28] sm:$0xff]
    %v396 = vld [vmem:[%s2 + $0x30] sm:$0xff]
    %v397 = vld [vmem:[%s2 + $0x38] sm:$0xff]
    %v398 = vld [vmem:[%s2 + $0x40] sm:$0xff]
    %v399 = vld [vmem:[%s2 + $0x48] sm:$0xff]
    %v400 = vld [vmem:[%s2 + $0x50] sm:$0xff]
    %v401 = vld [vmem:[%s2 + $0x58] sm:$0xff]
    %v402 = vld [vmem:[%s2 + $0x60] sm:$0xff]
    %v403 = vld [vmem:[%s2 + $0x68] sm:$0xff]
    %v404 = vld [vmem:[%s2 + $0x70] sm:$0xff]
    %v405 = vld [vmem:[%s2 + $0x78] sm:$0xff]
    %v406 = vld [vmem:[%s2 + $0x80] sm:$0xff]
    %v407 = vld [vmem:[%s2 + $0x88] sm:$0xff]
    %v408 = vld [vmem:[%s2 + $0x90] sm:$0xff]
    %v409 = vld [vmem:[%s2 + $0x98] sm:$0xff]
    %v410 = vld [vmem:[%s2 + $0xa0] sm:$0xff]
    %v411 = vld [vmem:[%s2 + $0xa8] sm:$0xff]
    %v412 = vld [vmem:[%s2 + $0xb0] sm:$0xff]
    %v413 = vld [vmem:[%s2 + $0xb8] sm:$0xff]
    %v414 = vld [vmem:[%s2 + $0xc0] sm:$0xff]
    %v415 = vld [vmem:[%s2 + $0xc8] sm:$0xff]
    %v416 = vld [vmem:[%s2 + $0xd0] sm:$0xff]
    %v417 = vld [vmem:[%s2 + $0xd8] sm:$0xff]
    %v418 = vld [vmem:[%s2 + $0xe0] sm:$0xff]
    %v419 = vld [vmem:[%s2 + $0xe8] sm:$0xff]
    %v420 = vld [vmem:[%s2 + $0xf0] sm:$0xff]
    %v421 = vld [vmem:[%s2 + $0xf8] sm:$0xff]
    %v422 = vld [vmem:[%s2 + $0x100] sm:$0xff]
    %v423 = vld [vmem:[%s2 + $0x108] sm:$0xff]
    %v424 = vld [vmem:[%s2 + $0x110] sm:$0xff]
    %v425 = vld [vmem:[%s2 + $0x118] sm:$0xff]
    %v426 = vld [vmem:[%s2 + $0x120] sm:$0xff]
    %v427 = vld [vmem:[%s2 + $0x128] sm:$0xff]
    %v428 = vld [vmem:[%s2 + $0x130] sm:$0xff]
    %v429 = vld [vmem:[%s2 + $0x138] sm:$0xff]
    %v430 = vld [vmem:[%s2 + $0x140] sm:$0xff]
    %v431 = vld [vmem:[%s2 + $0x148] sm:$0xff]
    %v432 = vld [vmem:[%s2 + $0x150] sm:$0xff]
    %v433 = vld [vmem:[%s2 + $0x158] sm:$0xff]
    %v434 = vld [vmem:[%s2 + $0x160] sm:$0xff]
    %v435 = vld [vmem:[%s2 + $0x168] sm:$0xff]
    %v436 = vld [vmem:[%s2 + $0x170] sm:$0xff]
    %v437 = vld [vmem:[%s2 + $0x178] sm:$0xff]
    %v438 = vld [vmem:[%s2 + $0x180] sm:$0xff]
    %v439 = vld [vmem:[%s2 + $0x188] sm:$0xff]
    %v440 = vld [vmem:[%s2 + $0x190] sm:$0xff]
    %v441 = vld [vmem:[%s2 + $0x198] sm:$0xff]
    %v442 = vld [vmem:[%s2 + $0x1a0] sm:$0xff]
    %v443 = vld [vmem:[%s2 + $0x1a8] sm:$0xff]
    %v444 = vld [vmem:[%s2 + $0x1b0] sm:$0xff]
    %v445 = vld [vmem:[%s2 + $0x1b8] sm:$0xff]
    %v446 = vld [vmem:[%s2 + $0x1c0] sm:$0xff]
    %v447 = vld [vmem:[%s2 + $0x1c8] sm:$0xff]
    %v448 = vld [vmem:[%s2 + $0x1d0] sm:$0xff]
    %v449 = vld [vmem:[%s2 + $0x1d8] sm:$0xff]
    %v450 = vld [vmem:[%s2 + $0x1e0] sm:$0xff]
    %v451 = vld [vmem:[%s2 + $0x1e8] sm:$0xff]
    %v452 = vld [vmem:[%s2 + $0x1f0] sm:$0xff]
    %v453 = vld [vmem:[%s2 + $0x1f8] sm:$0xff]
    %v454 = vld [vmem:[%s2 + $0x200] sm:$0xff]
    %v455 = vld [vmem:[%s2 + $0x208] sm:$0xff]
    %v456 = vld [vmem:[%s2 + $0x210] sm:$0xff]
    %v457 = vld [vmem:[%s2 + $0x218] sm:$0xff]
    %v458 = vld [vmem:[%s2 + $0x220] sm:$0xff]
    %v459 = vld [vmem:[%s2 + $0x228] sm:$0xff]
    %v460 = vld [vmem:[%s2 + $0x230] sm:$0xff]
    %v461 = vld [vmem:[%s2 + $0x238] sm:$0xff]
    %v462 = vld [vmem:[%s2 + $0x240] sm:$0xff]
    %v463 = vld [vmem:[%s2 + $0x248] sm:$0xff]
    %v464 = vld [vmem:[%s2 + $0x250] sm:$0xff]
    %v465 = vld [vmem:[%s2 + $0x258] sm:$0xff]
    %v466 = vld [vmem:[%s2 + $0x260] sm:$0xff]
    %v467 = vld [vmem:[%s2 + $0x268] sm:$0xff]
    %v468 = vld [vmem:[%s2 + $0x270] sm:$0xff]
    %v469 = vld [vmem:[%s2 + $0x278] sm:$0xff]
    %v470 = vld [vmem:[%s2 + $0x280] sm:$0xff]
    %v471 = vld [vmem:[%s2 + $0x288] sm:$0xff]
    %v472 = vld [vmem:[%s2 + $0x290] sm:$0xff]
    %v473 = vld [vmem:[%s2 + $0x298] sm:$0xff]
    %v474 = vld [vmem:[%s2 + $0x2a0] sm:$0xff]
    %v475 = vld [vmem:[%s2 + $0x2a8] sm:$0xff]
    %v476 = vld [vmem:[%s2 + $0x2b0] sm:$0xff]
    %v477 = vld [vmem:[%s2 + $0x2b8] sm:$0xff]
    %v478 = vld [vmem:[%s2 + $0x2c0] sm:$0xff]
    %v479 = vld [vmem:[%s2 + $0x2c8] sm:$0xff]
    %v480 = vld [vmem:[%s2 + $0x2d0] sm:$0xff]
    %v481 = vld [vmem:[%s2 + $0x2d8] sm:$0xff]
    %v482 = vld [vmem:[%s2 + $0x2e0] sm:$0xff]
    %v483 = vld [vmem:[%s2 + $0x2e8] sm:$0xff]
    %v484 = vld [vmem:[%s2 + $0x2f0] sm:$0xff]
    %v485 = vld [vmem:[%s2 + $0x2f8] sm:$0xff]
    %v486 = vld [vmem:[%s2 + $0x300] sm:$0xff]
    %v487 = vld [vmem:[%s2 + $0x308] sm:$0xff]
    %v488 = vld [vmem:[%s2 + $0x310] sm:$0xff]
    %v489 = vld [vmem:[%s2 + $0x318] sm:$0xff]
    %v490 = vld [vmem:[%s2 + $0x320] sm:$0xff]
    %v491 = vld [vmem:[%s2 + $0x328] sm:$0xff]
    %v492 = vld [vmem:[%s2 + $0x330] sm:$0xff]
    %v493 = vld [vmem:[%s2 + $0x338] sm:$0xff]
    %v494 = vld [vmem:[%s2 + $0x340] sm:$0xff]
    %v495 = vld [vmem:[%s2 + $0x348] sm:$0xff]
    %v496 = vld [vmem:[%s2 + $0x350] sm:$0xff]
    %v497 = vld [vmem:[%s2 + $0x358] sm:$0xff]
    %v498 = vld [vmem:[%s2 + $0x360] sm:$0xff]
    %v499 = vld [vmem:[%s2 + $0x368] sm:$0xff]
    %v500 = vld [vmem:[%s2 + $0x370] sm:$0xff]
    %v501 = vld [vmem:[%s2 + $0x378] sm:$0xff]
    %v502 = vld [vmem:[%s2 + $0x380] sm:$0xff]
    %v503 = vld [vmem:[%s2 + $0x388] sm:$0xff]
    %v504 = vld [vmem:[%s2 + $0x390] sm:$0xff]
    %v505 = vld [vmem:[%s2 + $0x398] sm:$0xff]
    %v506 = vld [vmem:[%s2 + $0x3a0] sm:$0xff]
    %v507 = vld [vmem:[%s2 + $0x3a8] sm:$0xff]
    %v508 = vld [vmem:[%s2 + $0x3b0] sm:$0xff]
    %v509 = vld [vmem:[%s2 + $0x3b8] sm:$0xff]
    %v510 = vld [vmem:[%s2 + $0x3c0] sm:$0xff]
    %v511 = vld [vmem:[%s2 + $0x3c8] sm:$0xff]
    %v512 = vld [vmem:[%s2 + $0x3d0] sm:$0xff]
    %v513 = vld [vmem:[%s2 + $0x3d8] sm:$0xff]
    %v514 = vld [vmem:[%s2 + $0x3e0] sm:$0xff]
    %v515 = vld [vmem:[%s2 + $0x3e8] sm:$0xff]
    %v516 = vld [vmem:[%s2 + $0x3f0] sm:$0xff]
    %v517 = vld [vmem:[%s2 + $0x3f8] sm:$0xff]
    %v518 = vld [vmem:[%s2 + $0x400] sm:$0x1]
    %v519 = vlaneseq
    %v520 = vshrl.u32 %v519, 7
    %v521 = vsub.s32 0, %v520
    %v522 = vrot.slane %v518, %v521
    %523 = vmatprep.subr.mxu0 0.0
    %524 = vmatpush1.msra.mxu0 %v390
    %525 = vmatprep.subr.mxu0 0.0
    %526 = vmatpush1.msra.mxu0 %v391
    %527 = vmatprep.subr.mxu0 0.0
    %528 = vmatpush1.msra.mxu0 %v392
    %529 = vmatprep.subr.mxu0 0.0
    %530 = vmatpush1.msra.mxu0 %v393
    %531 = vmatprep.subr.mxu0 0.0
    %532 = vmatpush1.msra.mxu0 %v394
    %533 = vmatprep.subr.mxu0 0.0
    %534 = vmatpush1.msra.mxu0 %v395
    %535 = vmatprep.subr.mxu0 0.0
    %536 = vmatpush1.msra.mxu0 %v396
    %537 = vmatprep.subr.mxu0 0.0
    %538 = vmatpush1.msra.mxu0 %v397
    %539 = vmatprep.subr.mxu0 0.0
    %540 = vmatpush1.msra.mxu0 %v398
    %541 = vmatprep.subr.mxu0 0.0
    %542 = vmatpush1.msra.mxu0 %v399
    %543 = vmatprep.subr.mxu0 0.0
    %544 = vmatpush1.msra.mxu0 %v400
    %545 = vmatprep.subr.mxu0 0.0
    %546 = vmatpush1.msra.mxu0 %v401
    %547 = vmatprep.subr.mxu0 0.0
    %548 = vmatpush1.msra.mxu0 %v402
    %549 = vmatprep.subr.mxu0 0.0
    %550 = vmatpush1.msra.mxu0 %v403
    %551 = vmatprep.subr.mxu0 0.0
    %552 = vmatpush1.msra.mxu0 %v404
    %553 = vmatprep.subr.mxu0 0.0
    %554 = vmatpush1.msra.mxu0 %v405
    %555 = vmatprep.subr.mxu0 0.0
    %556 = vmatpush1.msra.mxu0 %v406
    %557 = vmatprep.subr.mxu0 0.0
    %558 = vmatpush1.msra.mxu0 %v407
    %559 = vmatprep.subr.mxu0 0.0
    %560 = vmatpush1.msra.mxu0 %v408
    %561 = vmatprep.subr.mxu0 0.0
    %562 = vmatpush1.msra.mxu0 %v409
    %563 = vmatprep.subr.mxu0 0.0
    %564 = vmatpush1.msra.mxu0 %v410
    %565 = vmatprep.subr.mxu0 0.0
    %566 = vmatpush1.msra.mxu0 %v411
    %567 = vmatprep.subr.mxu0 0.0
    %568 = vmatpush1.msra.mxu0 %v412
    %569 = vmatprep.subr.mxu0 0.0
    %570 = vmatpush1.msra.mxu0 %v413
    %571 = vmatprep.subr.mxu0 0.0
    %572 = vmatpush1.msra.mxu0 %v414
    %573 = vmatprep.subr.mxu0 0.0
    %574 = vmatpush1.msra.mxu0 %v415
    %575 = vmatprep.subr.mxu0 0.0
    %576 = vmatpush1.msra.mxu0 %v416
    %577 = vmatprep.subr.mxu0 0.0
    %578 = vmatpush1.msra.mxu0 %v417
    %579 = vmatprep.subr.mxu0 0.0
    %580 = vmatpush1.msra.mxu0 %v418
    %581 = vmatprep.subr.mxu0 0.0
    %582 = vmatpush1.msra.mxu0 %v419
    %583 = vmatprep.subr.mxu0 0.0
    %584 = vmatpush1.msra.mxu0 %v420
    %585 = vmatprep.subr.mxu0 0.0
    %586 = vmatpush1.msra.mxu0 %v421
    %587 = vmatprep.mubr.f32.mxu0 %v383
    %588 = vmatmul.mubr.f32.gmra.mrb[0].mxu0 %v382
    %v589 = vpop.f32.mrb[0].mxu0
    %v590 = vadd.f32 %v522, %v589
    %v591 = vpop.f32.mrb[0].mxu0
    %592 = vdwg.mxu0
    %593 = vmatprep.subr.mxu0 0.0
    %594 = vmatpush1.msra.mxu0 %v422
    %595 = vmatprep.subr.mxu0 0.0
    %596 = vmatpush1.msra.mxu0 %v423
    %597 = vmatprep.subr.mxu0 0.0
    %598 = vmatpush1.msra.mxu0 %v424
    %599 = vmatprep.subr.mxu0 0.0
    %600 = vmatpush1.msra.mxu0 %v425
    %601 = vmatprep.subr.mxu0 0.0
    %602 = vmatpush1.msra.mxu0 %v426
    %603 = vmatprep.subr.mxu0 0.0
    %604 = vmatpush1.msra.mxu0 %v427
    %605 = vmatprep.subr.mxu0 0.0
    %606 = vmatpush1.msra.mxu0 %v428
    %607 = vmatprep.subr.mxu0 0.0
    %608 = vmatpush1.msra.mxu0 %v429
    %609 = vmatprep.subr.mxu0 0.0
    %610 = vmatpush1.msra.mxu0 %v430
    %611 = vmatprep.subr.mxu0 0.0
    %612 = vmatpush1.msra.mxu0 %v431
    %613 = vmatprep.subr.mxu0 0.0
    %614 = vmatpush1.msra.mxu0 %v432
    %615 = vmatprep.subr.mxu0 0.0
    %616 = vmatpush1.msra.mxu0 %v433
    %617 = vmatprep.subr.mxu0 0.0
    %618 = vmatpush1.msra.mxu0 %v434
    %619 = vmatprep.subr.mxu0 0.0
    %620 = vmatpush1.msra.mxu0 %v435
    %621 = vmatprep.subr.mxu0 0.0
    %622 = vmatpush1.msra.mxu0 %v436
    %623 = vmatprep.subr.mxu0 0.0
    %624 = vmatpush1.msra.mxu0 %v437
    %625 = vmatprep.subr.mxu0 0.0
    %626 = vmatpush1.msra.mxu0 %v438
    %627 = vmatprep.subr.mxu0 0.0
    %628 = vmatpush1.msra.mxu0 %v439
    %629 = vmatprep.subr.mxu0 0.0
    %630 = vmatpush1.msra.mxu0 %v440
    %631 = vmatprep.subr.mxu0 0.0
    %632 = vmatpush1.msra.mxu0 %v441
    %633 = vmatprep.subr.mxu0 0.0
    %634 = vmatpush1.msra.mxu0 %v442
    %635 = vmatprep.subr.mxu0 0.0
    %636 = vmatpush1.msra.mxu0 %v443
    %637 = vmatprep.subr.mxu0 0.0
    %638 = vmatpush1.msra.mxu0 %v444
    %639 = vmatprep.subr.mxu0 0.0
    %640 = vmatpush1.msra.mxu0 %v445
    %641 = vmatprep.subr.mxu0 0.0
    %642 = vmatpush1.msra.mxu0 %v446
    %643 = vmatprep.subr.mxu0 0.0
    %644 = vmatpush1.msra.mxu0 %v447
    %645 = vmatprep.subr.mxu0 0.0
    %646 = vmatpush1.msra.mxu0 %v448
    %647 = vmatprep.subr.mxu0 0.0
    %648 = vmatpush1.msra.mxu0 %v449
    %649 = vmatprep.subr.mxu0 0.0
    %650 = vmatpush1.msra.mxu0 %v450
    %651 = vmatprep.subr.mxu0 0.0
    %652 = vmatpush1.msra.mxu0 %v451
    %653 = vmatprep.subr.mxu0 0.0
    %654 = vmatpush1.msra.mxu0 %v452
    %655 = vmatprep.subr.mxu0 0.0
    %656 = vmatpush1.msra.mxu0 %v453
    %657 = vmatprep.mubr.f32.mxu0 %v385
    %658 = vmatmul.mubr.f32.gmra.mrb[0].mxu0 %v384
    %v659 = vpop.f32.mrb[0].mxu0
    %v660 = vadd.f32 %v590, %v659
    %v661 = vpop.f32.mrb[0].mxu0
    %662 = vdwg.mxu0
    %663 = vmatprep.subr.mxu0 0.0
    %664 = vmatpush1.msra.mxu0 %v454
    %665 = vmatprep.subr.mxu0 0.0
    %666 = vmatpush1.msra.mxu0 %v455
    %667 = vmatprep.subr.mxu0 0.0
    %668 = vmatpush1.msra.mxu0 %v456
    %669 = vmatprep.subr.mxu0 0.0
    %670 = vmatpush1.msra.mxu0 %v457
    %671 = vmatprep.subr.mxu0 0.0
    %672 = vmatpush1.msra.mxu0 %v458
    %673 = vmatprep.subr.mxu0 0.0
    %674 = vmatpush1.msra.mxu0 %v459
    %675 = vmatprep.subr.mxu0 0.0
    %676 = vmatpush1.msra.mxu0 %v460
    %677 = vmatprep.subr.mxu0 0.0
    %678 = vmatpush1.msra.mxu0 %v461
    %679 = vmatprep.subr.mxu0 0.0
    %680 = vmatpush1.msra.mxu0 %v462
    %681 = vmatprep.subr.mxu0 0.0
    %682 = vmatpush1.msra.mxu0 %v463
    %683 = vmatprep.subr.mxu0 0.0
    %684 = vmatpush1.msra.mxu0 %v464
    %685 = vmatprep.subr.mxu0 0.0
    %686 = vmatpush1.msra.mxu0 %v465
    %687 = vmatprep.subr.mxu0 0.0
    %688 = vmatpush1.msra.mxu0 %v466
    %689 = vmatprep.subr.mxu0 0.0
    %690 = vmatpush1.msra.mxu0 %v467
    %691 = vmatprep.subr.mxu0 0.0
    %692 = vmatpush1.msra.mxu0 %v468
    %693 = vmatprep.subr.mxu0 0.0
    %694 = vmatpush1.msra.mxu0 %v469
    %695 = vmatprep.subr.mxu0 0.0
    %696 = vmatpush1.msra.mxu0 %v470
    %697 = vmatprep.subr.mxu0 0.0
    %698 = vmatpush1.msra.mxu0 %v471
    %699 = vmatprep.subr.mxu0 0.0
    %700 = vmatpush1.msra.mxu0 %v472
    %701 = vmatprep.subr.mxu0 0.0
    %702 = vmatpush1.msra.mxu0 %v473
    %703 = vmatprep.subr.mxu0 0.0
    %704 = vmatpush1.msra.mxu0 %v474
    %705 = vmatprep.subr.mxu0 0.0
    %706 = vmatpush1.msra.mxu0 %v475
    %707 = vmatprep.subr.mxu0 0.0
    %708 = vmatpush1.msra.mxu0 %v476
    %709 = vmatprep.subr.mxu0 0.0
    %710 = vmatpush1.msra.mxu0 %v477
    %711 = vmatprep.subr.mxu0 0.0
    %712 = vmatpush1.msra.mxu0 %v478
    %713 = vmatprep.subr.mxu0 0.0
    %714 = vmatpush1.msra.mxu0 %v479
    %715 = vmatprep.subr.mxu0 0.0
    %716 = vmatpush1.msra.mxu0 %v480
    %717 = vmatprep.subr.mxu0 0.0
    %718 = vmatpush1.msra.mxu0 %v481
    %719 = vmatprep.subr.mxu0 0.0
    %720 = vmatpush1.msra.mxu0 %v482
    %721 = vmatprep.subr.mxu0 0.0
    %722 = vmatpush1.msra.mxu0 %v483
    %723 = vmatprep.subr.mxu0 0.0
    %724 = vmatpush1.msra.mxu0 %v484
    %725 = vmatprep.subr.mxu0 0.0
    %726 = vmatpush1.msra.mxu0 %v485
    %727 = vmatprep.mubr.f32.mxu0 %v387
    %728 = vmatmul.mubr.f32.gmra.mrb[0].mxu0 %v386
    %v729 = vpop.f32.mrb[0].mxu0
    %v730 = vadd.f32 %v660, %v729
    %v731 = vpop.f32.mrb[0].mxu0
    %732 = vdwg.mxu0
    %733 = vmatprep.subr.mxu0 0.0
    %734 = vmatpush1.msra.mxu0 %v486
    %735 = vmatprep.subr.mxu0 0.0
    %736 = vmatpush1.msra.mxu0 %v487
    %737 = vmatprep.subr.mxu0 0.0
    %738 = vmatpush1.msra.mxu0 %v488
    %739 = vmatprep.subr.mxu0 0.0
    %740 = vmatpush1.msra.mxu0 %v489
    %741 = vmatprep.subr.mxu0 0.0
    %742 = vmatpush1.msra.mxu0 %v490
    %743 = vmatprep.subr.mxu0 0.0
    %744 = vmatpush1.msra.mxu0 %v491
    %745 = vmatprep.subr.mxu0 0.0
    %746 = vmatpush1.msra.mxu0 %v492
    %747 = vmatprep.subr.mxu0 0.0
    %748 = vmatpush1.msra.mxu0 %v493
    %749 = vmatprep.subr.mxu0 0.0
    %750 = vmatpush1.msra.mxu0 %v494
    %751 = vmatprep.subr.mxu0 0.0
    %752 = vmatpush1.msra.mxu0 %v495
    %753 = vmatprep.subr.mxu0 0.0
    %754 = vmatpush1.msra.mxu0 %v496
    %755 = vmatprep.subr.mxu0 0.0
    %756 = vmatpush1.msra.mxu0 %v497
    %757 = vmatprep.subr.mxu0 0.0
    %758 = vmatpush1.msra.mxu0 %v498
    %759 = vmatprep.subr.mxu0 0.0
    %760 = vmatpush1.msra.mxu0 %v499
    %761 = vmatprep.subr.mxu0 0.0
    %762 = vmatpush1.msra.mxu0 %v500
    %763 = vmatprep.subr.mxu0 0.0
    %764 = vmatpush1.msra.mxu0 %v501
    %765 = vmatprep.subr.mxu0 0.0
    %766 = vmatpush1.msra.mxu0 %v502
    %767 = vmatprep.subr.mxu0 0.0
    %768 = vmatpush1.msra.mxu0 %v503
    %769 = vmatprep.subr.mxu0 0.0
    %770 = vmatpush1.msra.mxu0 %v504
    %771 = vmatprep.subr.mxu0 0.0
    %772 = vmatpush1.msra.mxu0 %v505
    %773 = vmatprep.subr.mxu0 0.0
    %774 = vmatpush1.msra.mxu0 %v506
    %775 = vmatprep.subr.mxu0 0.0
    %776 = vmatpush1.msra.mxu0 %v507
    %777 = vmatprep.subr.mxu0 0.0
    %778 = vmatpush1.msra.mxu0 %v508
    %779 = vmatprep.subr.mxu0 0.0
    %780 = vmatpush1.msra.mxu0 %v509
    %781 = vmatprep.subr.mxu0 0.0
    %782 = vmatpush1.msra.mxu0 %v510
    %783 = vmatprep.subr.mxu0 0.0
    %784 = vmatpush1.msra.mxu0 %v511
    %785 = vmatprep.subr.mxu0 0.0
    %786 = vmatpush1.msra.mxu0 %v512
    %787 = vmatprep.subr.mxu0 0.0
    %788 = vmatpush1.msra.mxu0 %v513
    %789 = vmatprep.subr.mxu0 0.0
    %790 = vmatpush1.msra.mxu0 %v514
    %791 = vmatprep.subr.mxu0 0.0
    %792 = vmatpush1.msra.mxu0 %v515
    %793 = vmatprep.subr.mxu0 0.0
    %794 = vmatpush1.msra.mxu0 %v516
    %795 = vmatprep.subr.mxu0 0.0
    %796 = vmatpush1.msra.mxu0 %v517
    %797 = vmatprep.mubr.f32.mxu0 %v389
    %798 = vmatmul.mubr.f32.gmra.mrb[0].mxu0 %v388
    %v799 = vpop.f32.mrb[0].mxu0
    %v800 = vadd.f32 %v730, %v799
    %v801 = vpop.f32.mrb[0].mxu0
    %802 = vdwg.mxu0
    %804 = vset.pattern.permute.xlu0 0
    %805 = vperm.xlu0 %804, %v800
    %v806 = vpop.permute.xlu0 %805
    %v808 = vadd.f32 %v806, %v800
    %809 = vrot.lane.b32.xlu0 %v800, 127
    %v810 = vpop.permute.xlu0 %809
    %vm812 = vcmask 48128
    %v813 = vsel %vm812, %v810, 0.0
    %814 = vadd.xlane.f32.xlu0 %v813
    %v815 = vpop.xlane.xlu0 %814
    %v816 = vrot.slane %v815, 4
    %v817 = vadd.f32 %v815, %v816
    %v818 = vrot.slane %v817, 2
    %v819 = vadd.f32 %v817, %v818
    %v820 = vrot.slane %v819, 1
    %v821 = vadd.f32 %v819, %v820
    %s822 = vtos %v821
    %v823 = vrcp.pop 48.0
    %s824 = vtos %v823
    %s825 = smul.f32 %s822, %s824
    %v826 = vstv %s825
    %v827 = vsub.f32 %v808, %v826
    %829 = vrot.lane.b32.xlu0 %v827, 127
    %v830 = vpop.permute.xlu0 %829
    %832 = vst.msk [vmem:[#allocation2] sm:$0xff] %vm812, %v830
    // Predicated region
    $region14: #{linear_ddqn_forward.1} parent=1 // pred_check
      _
    $region15: #{linear_ddqn_forward.1} parent=1 // pred_check_branch
      %834 = sbr.rel (0) target = $region17
    $region16: #{linear_ddqn_forward.1} parent=1 // pred_region
      %s836 = ssub.s32 128, 128
      %837 = vsyncadd [#allocation3], %s836
      %s839 = sshll.u32 [#allocation2], 4
      %s840 = int_to_ptr.vmem [resolvable:$true] %s839
      %842 = dma.vmem_to_hbm [thread:$0]  %s840, 128, %s3, [#allocation3]
    $region17: #{linear_ddqn_forward.1} parent=1 // pred_fallthru
      _
    // Predicated region
    $region18: #{linear_ddqn_forward.1} parent=1 // pred_check
      _
    $region19: #{linear_ddqn_forward.1} parent=1 // pred_check_branch
      %844 = sbr.rel (0) target = $region21
    $region20: #{linear_ddqn_forward.1} parent=1 // pred_region
      %845 = dma.done [#allocation3], 128
    $region21: #{linear_ddqn_forward.1} parent=1 // pred_fallthru
      _
    %846 = vsyncpa [#allocation3], 1

</llo_original>
